<compile_context>
chip_gen: v7x
topology: tpu7x:2x2x1
jax: 0.10.0
libtpu: 0.0.40
codegen_flags: <defaults>
</compile_context>

<pallas_src>
import jax
import jax.numpy as jnp
from jax.experimental import pallas as pl
from jax.experimental.pallas import tpu as pltpu

EPS = 1e-5  # nn.BatchNorm2d default eps


# --------------------------------------------------------------------------- kernels
def conv_stats_kernel(x_ref, w_ref, y_ref, stats_ref):
    # x_ref:     (NB, H+2, Kpad)   bf16  zero-padded images, lane = w_in*Cin + ci (lane-padded)
    # w_ref:     (3, Kpad, lanes)  bf16  per-vertical-tap width-banded weight matrices
    # y_ref:     (NB, H, lanes)    bf16  conv output, lane = w_out*Cout + co (lane-dense)
    # stats_ref: (1, 2, lanes)     f32   lane-dense per-column [sum, sum_sq] for this block
    NB, H, lanes = y_ref.shape
    K = x_ref.shape[2]

    # Three accumulating MXU contractions (one per vertical tap).  Each tap uses a
    # sublane-shifted slice of the same tile; the lane axis stays contiguous, so there is
    # no cross-lane relayout and no K concatenation.  M = NB*H fills the MXU rows.
    acc = jnp.zeros((NB * H, lanes), jnp.float32)
    for kh in range(3):  # kernel_size = 3 (module default)
        xk = x_ref[:, kh:kh + H, :].reshape(NB * H, K)
        acc = acc + jnp.dot(xk, w_ref[kh], preferred_element_type=jnp.float32)

    y_ref[...] = acc.reshape(NB, H, lanes).astype(y_ref.dtype)

    # One-pass BatchNorm partial statistics, emitted lane-dense (per (w_out, co) column).
    # The stride-Cout collapse over w and over batch blocks happens in the wrapper.
    s = jnp.sum(acc, axis=0, keepdims=True)        # (1, lanes)
    ss = jnp.sum(acc * acc, axis=0, keepdims=True)  # (1, lanes)
    stats_ref[0] = jnp.concatenate([s, ss], axis=0)


def bn_prelu_kernel(y_ref, scale_ref, shift_ref, alpha_ref, o_ref):
    # y_ref:               (NBe, H, lanes) bf16   conv output block
    # scale_ref/shift_ref: (1, 1, lanes)   f32    folded BN scale/shift, tiled per lane
    # alpha_ref:           (1, 1)          f32    shared PReLU slope (SMEM)
    # o_ref:               (NBe, H, lanes) f32    lane-dense output
    yn = y_ref[...].astype(jnp.float32) * scale_ref[...] + shift_ref[...]
    a = alpha_ref[0, 0]
    o_ref[...] = jnp.where(yn >= 0.0, yn, a * yn).astype(o_ref.dtype)


# --------------------------------------------------------------------------- helpers
def _banded_weight(w_oihw, W, Kpad):
    """Repack (Cout, Cin, 3, 3) weights into per-tap width-banded matrices (3, Kpad, W*Cout).

    For tap kh: row = w_in*Cin + ci, column = w_out*Cout + co,
    entry = w[co, ci, kh, w_in - w_out] when 0 <= w_in - w_out < 3, else 0.
    Rows >= (W+2)*Cin are zero padding (the input lanes there are zero too).
    """
    Cout, Cin, KH, KW = w_oihw.shape
    Wp = W + 2
    wk = jnp.transpose(w_oihw, (2, 3, 1, 0))                       # (kh, kw, Cin, Cout)
    diff = jnp.arange(Wp)[:, None] - jnp.arange(W)[None, :]        # w_in - w_out
    valid = (diff >= 0) & (diff < KW)
    wb = wk[:, jnp.clip(diff, 0, KW - 1), :, :]                    # (3, Wp, W, Cin, Cout)
    wb = jnp.where(valid[None, :, :, None, None], wb, 0.0)
    wb = wb.transpose(0, 1, 3, 2, 4).reshape(KH, Wp * Cin, W * Cout)
    return jnp.pad(wb, ((0, 0), (0, Kpad - Wp * Cin), (0, 0)))


def _pick_block(n, cap):
    """Largest divisor of n that is <= cap (>= 1)."""
    cap = max(1, min(n, cap))
    for d in range(cap, 0, -1):
        if n % d == 0:
            return d
    return 1


# --------------------------------------------------------------------------- wrapper
@jax.jit
def conv_block_forward(x_nchw, w_oihw, gamma, beta, alpha):
    """x_nchw: (N, Cin, H, W) f32; w_oihw: (Cout, Cin, 3, 3); returns (N, Cout, H, W) f32."""
    N, Cin, H, W = x_nchw.shape
    Cout, _, KH, KW = w_oihw.shape
    assert KH == 3 and KW == 3, "ConvBlock kernel assumes 3x3 conv (module default)"
    Hp, Wp = H + 2, W + 2
    lanes = W * Cout
    Kpad = ((Wp * Cin + 127) // 128) * 128          # lane-tile aligned K per tap

    # ---- layout plumbing (wrapper side): NHWC, zero pad, flatten (w, ci) onto lanes,
    #      lane-pad to 128 multiple, bf16 for the MXU.
    x = jnp.transpose(x_nchw, (0, 2, 3, 1))
    xp = jnp.pad(x, ((0, 0), (1, 1), (1, 1), (0, 0)))              # padding_type='zero'
    x2 = xp.reshape(N, Hp, Wp * Cin)
    x2 = jnp.pad(x2, ((0, 0), (0, 0), (0, Kpad - Wp * Cin))).astype(jnp.bfloat16)
    wcat = _banded_weight(w_oihw.astype(jnp.float32), W, Kpad).astype(jnp.bfloat16)

    # ---- conv + stats: batch-block grid so the matmul M axis is NB*H (>=256 when possible).
    target_rows = 256                                              # v6e/v7x MXU height
    nb_cap_rows = -(-target_rows // H)
    per_img_bytes = (Hp * Kpad + H * lanes) * 2 + H * lanes * 4    # x + y blocks + f32 acc
    nb_cap_vmem = max(1, (4 << 20) // per_img_bytes)
    NB = _pick_block(N, min(nb_cap_rows, nb_cap_vmem))
    G = N // NB

    conv_cost = pl.CostEstimate(
        flops=2 * N * H * (3 * Kpad) * lanes,
        transcendentals=0,
        bytes_accessed=x2.size * 2 + wcat.size * 2 + N * H * lanes * 2 + G * 2 * lanes * 4)

    y2d, stats = pl.pallas_call(
        conv_stats_kernel,
        out_shape=(jax.ShapeDtypeStruct((N, H, lanes), jnp.bfloat16),
                   jax.ShapeDtypeStruct((G, 2, lanes), jnp.float32)),
        grid=(G,),
        in_specs=[
            pl.BlockSpec((NB, Hp, Kpad), lambda g: (g, 0, 0)),
            pl.BlockSpec((3, Kpad, lanes), lambda g: (0, 0, 0)),
        ],
        out_specs=(
            pl.BlockSpec((NB, H, lanes), lambda g: (g, 0, 0)),
            pl.BlockSpec((1, 2, lanes), lambda g: (g, 0, 0)),
        ),
        compiler_params=pltpu.CompilerParams(dimension_semantics=("parallel",)),
        cost_estimate=conv_cost,
    )(x2, wcat)

    # ---- fold BN (training-mode biased batch stats) into one per-channel scale/shift.
    # One-pass E[x^2]-E[x]^2 in f32: fine at bf16-level tolerance (intentional trade-off).
    count = N * H * W
    tot = jnp.sum(stats, axis=0)                                   # (2, lanes)
    tot = tot.reshape(2, W, Cout).sum(axis=1)                      # collapse w -> (2, Cout)
    mean = tot[0] / count
    var = jnp.maximum(tot[1] / count - mean * mean, 0.0)
    scale = gamma.astype(jnp.float32) * jax.lax.rsqrt(var + EPS)
    shift = beta.astype(jnp.float32) - mean * scale
    scale_l = jnp.tile(scale, W).reshape(1, 1, lanes)              # lane = w*Cout + co
    shift_l = jnp.tile(shift, W).reshape(1, 1, lanes)
    alpha2 = alpha.reshape(1, 1).astype(jnp.float32)

    # ---- BN + PReLU epilogue: whole batch block per grid step (mem-bound -> big tiles).
    per_img_ep = H * lanes * (2 + 4)
    NBe = _pick_block(N, max(1, (2 << 20) // per_img_ep))
    Ge = N // NBe

    ep_cost = pl.CostEstimate(
        flops=4 * N * H * lanes, transcendentals=0,
        bytes_accessed=N * H * lanes * (2 + 4) + 2 * lanes * 4)

    out2d = pl.pallas_call(
        bn_prelu_kernel,
        out_shape=jax.ShapeDtypeStruct((N, H, lanes), jnp.float32),
        grid=(Ge,),
        in_specs=[
            pl.BlockSpec((NBe, H, lanes), lambda g: (g, 0, 0)),
            pl.BlockSpec((1, 1, lanes), lambda g: (0, 0, 0)),
            pl.BlockSpec((1, 1, lanes), lambda g: (0, 0, 0)),
            pl.BlockSpec(memory_space=pltpu.MemorySpace.SMEM),
        ],
        out_specs=pl.BlockSpec((NBe, H, lanes), lambda g: (g, 0, 0)),
        compiler_params=pltpu.CompilerParams(dimension_semantics=("parallel",)),
        cost_estimate=ep_cost,
    )(y2d, scale_l, shift_l, alpha2)

    out_nhwc = out2d.reshape(N, H, W, Cout)
    return jnp.transpose(out_nhwc, (0, 3, 1, 2))


# --------------------------------------------------------------------------- reference
def reference_forward(x, w, gamma, beta, alpha):
    """Plain-JAX f32 reference matching PyTorch ConvBlock forward (training-mode BN)."""
    y = jax.lax.conv_general_dilated(
        x, w, window_strides=(1, 1), padding=((1, 1), (1, 1)),
        dimension_numbers=("NCHW", "OIHW", "NCHW"))
    mean = jnp.mean(y, axis=(0, 2, 3), keepdims=True)
    var = jnp.mean((y - mean) ** 2, axis=(0, 2, 3), keepdims=True)
    yn = (y - mean) * jax.lax.rsqrt(var + EPS)
    yn = yn * gamma.reshape(1, -1, 1, 1) + beta.reshape(1, -1, 1, 1)
    return jnp.where(yn >= 0, yn, alpha.reshape(()) * yn)


if __name__ == "__main__":
    key = jax.random.PRNGKey(0)
    k_x, k_w = jax.random.split(key)

    N, Cin, Cout, H, W = 2, 4, 8, 16, 16

    x = jax.random.normal(k_x, (N, Cin, H, W), dtype=jnp.float32)
    # Deterministic parameter init (conv weight ~ small normal, BN weight=1 / bias=0,
    # PReLU slope=0.25 per PyTorch defaults).
    w = 0.1 * jax.random.normal(k_w, (Cout, Cin, 3, 3), dtype=jnp.float32)
    gamma = jnp.ones((Cout,), jnp.float32)
    beta = jnp.zeros((Cout,), jnp.float32)
    alpha = jnp.array([0.25], jnp.float32)

    out = conv_block_forward(x, w, gamma, beta, alpha)
    out = jax.block_until_ready(out)

    ref = reference_forward(x, w, gamma, beta, alpha)
    assert out.shape == (N, Cout, H, W)
    # bf16 MXU inputs + bf16 conv-output storage with f32 accumulation/stats:
    # compare against the f32 reference at bf16-level tolerance.
    err = float(jnp.max(jnp.abs(out - ref)))
    assert jnp.allclose(out, ref, rtol=3e-2, atol=3e-2), err

    print("KERNEL_OK")
</pallas_src>

<mosaic_0001>
module attributes {stable_mosaic.version = 11 : i64} {
  func.func @conv_stats_kernel(%arg0: i32, %arg1: memref<2x18x128xbf16, #tpu.memory_space<vmem>>, %arg2: memref<3x128x128xbf16, #tpu.memory_space<vmem>>, %arg3: memref<2x16x128xbf16, #tpu.memory_space<vmem>>, %arg4: memref<1x2x128xf32, #tpu.memory_space<vmem>>) attributes {dimension_semantics = [#tpu.dimension_semantics<parallel>], iteration_bounds = array<i64: 1>, scalar_prefetch = 0 : i64, scratch_operands = 0 : i64, tpu.core_type = #tpu.core_type<tc>, window_params = [{transform_indices = @transform_0, window_bounds = array<i64: 2, 18, 128>}, {pipeline_mode = #tpu.pipeline_mode<synchronous>, transform_indices = @transform_1, window_bounds = array<i64: 3, 128, 128>}, {transform_indices = @transform_2, window_bounds = array<i64: 2, 16, 128>}, {transform_indices = @transform_3, window_bounds = array<i64: 1, 2, 128>}]} {
    %cst = arith.constant 0.000000e+00 : f32
    %0 = vector.broadcast %cst : f32 to vector<32x128xf32>
    %c0 = arith.constant 0 : index
    %c0_0 = arith.constant 0 : index
    %c0_1 = arith.constant 0 : index
    %1 = vector.load %arg1[%c0, %c0_0, %c0_1] : memref<2x18x128xbf16, #tpu.memory_space<vmem>>, vector<2x16x128xbf16>
    %2 = vector.shape_cast %1 : vector<2x16x128xbf16> to vector<32x128xbf16>
    %c0_2 = arith.constant 0 : index
    %c0_3 = arith.constant 0 : index
    %c0_4 = arith.constant 0 : index
    %3 = vector.load %arg2[%c0_2, %c0_3, %c0_4] : memref<3x128x128xbf16, #tpu.memory_space<vmem>>, vector<1x128x128xbf16>
    %4 = vector.shape_cast %3 : vector<1x128x128xbf16> to vector<128x128xbf16>
    %cst_5 = arith.constant dense<0.000000e+00> : vector<32x128xf32>
    %5 = tpu.matmul %2, %4, %cst_5 {dimension_numbers = #tpu.dot_dimension_numbers<[1], [0], [0], [1], [0, 0, 1, 1], [], []>} : vector<32x128xbf16>, vector<128x128xbf16>, vector<32x128xf32> -> vector<32x128xf32>
    %6 = arith.addf %0, %5 : vector<32x128xf32>
    %c0_6 = arith.constant 0 : index
    %c1 = arith.constant 1 : index
    %c0_7 = arith.constant 0 : index
    %7 = vector.load %arg1[%c0_6, %c1, %c0_7] : memref<2x18x128xbf16, #tpu.memory_space<vmem>>, vector<2x16x128xbf16>
    %8 = vector.shape_cast %7 : vector<2x16x128xbf16> to vector<32x128xbf16>
    %c1_8 = arith.constant 1 : index
    %c0_9 = arith.constant 0 : index
    %c0_10 = arith.constant 0 : index
    %9 = vector.load %arg2[%c1_8, %c0_9, %c0_10] : memref<3x128x128xbf16, #tpu.memory_space<vmem>>, vector<1x128x128xbf16>
    %10 = vector.shape_cast %9 : vector<1x128x128xbf16> to vector<128x128xbf16>
    %cst_11 = arith.constant dense<0.000000e+00> : vector<32x128xf32>
    %11 = tpu.matmul %8, %10, %cst_11 {dimension_numbers = #tpu.dot_dimension_numbers<[1], [0], [0], [1], [0, 0, 1, 1], [], []>} : vector<32x128xbf16>, vector<128x128xbf16>, vector<32x128xf32> -> vector<32x128xf32>
    %12 = arith.addf %6, %11 : vector<32x128xf32>
    %c0_12 = arith.constant 0 : index
    %c2 = arith.constant 2 : index
    %c0_13 = arith.constant 0 : index
    %13 = vector.load %arg1[%c0_12, %c2, %c0_13] : memref<2x18x128xbf16, #tpu.memory_space<vmem>>, vector<2x16x128xbf16>
    %14 = vector.shape_cast %13 : vector<2x16x128xbf16> to vector<32x128xbf16>
    %c2_14 = arith.constant 2 : index
    %c0_15 = arith.constant 0 : index
    %c0_16 = arith.constant 0 : index
    %15 = vector.load %arg2[%c2_14, %c0_15, %c0_16] : memref<3x128x128xbf16, #tpu.memory_space<vmem>>, vector<1x128x128xbf16>
    %16 = vector.shape_cast %15 : vector<1x128x128xbf16> to vector<128x128xbf16>
    %cst_17 = arith.constant dense<0.000000e+00> : vector<32x128xf32>
    %17 = tpu.matmul %14, %16, %cst_17 {dimension_numbers = #tpu.dot_dimension_numbers<[1], [0], [0], [1], [0, 0, 1, 1], [], []>} : vector<32x128xbf16>, vector<128x128xbf16>, vector<32x128xf32> -> vector<32x128xf32>
    %18 = arith.addf %12, %17 : vector<32x128xf32>
    %19 = vector.shape_cast %18 : vector<32x128xf32> to vector<2x16x128xf32>
    %20 = arith.truncf %19 : vector<2x16x128xf32> to vector<2x16x128xbf16>
    %c0_18 = arith.constant 0 : index
    %c0_19 = arith.constant 0 : index
    %c0_20 = arith.constant 0 : index
    %21 = vector.load %arg3[%c0_18, %c0_19, %c0_20] : memref<2x16x128xbf16, #tpu.memory_space<vmem>>, vector<2x16x128xbf16>
    tpu.vector_store %arg3[%c0_18, %c0_19, %c0_20], %20 {strides = array<i32>} : memref<2x16x128xbf16, #tpu.memory_space<vmem>>, vector<2x16x128xbf16>,
    %cst_21 = arith.constant dense<0.000000e+00> : vector<128xf32>
    %22 = vector.multi_reduction <add>, %18, %cst_21 [0] : vector<32x128xf32> to vector<128xf32>
    %23 = vector.shape_cast %22 : vector<128xf32> to vector<1x128xf32>
    %24 = arith.mulf %18, %18 : vector<32x128xf32>
    %cst_22 = arith.constant dense<0.000000e+00> : vector<128xf32>
    %25 = vector.multi_reduction <add>, %24, %cst_22 [0] : vector<32x128xf32> to vector<128xf32>
    %26 = vector.shape_cast %25 : vector<128xf32> to vector<1x128xf32>
    %27 = tpu.concatenate %23, %26 in 0 : vector<1x128xf32>, vector<1x128xf32> -> vector<2x128xf32>
    %c0_23 = arith.constant 0 : index
    %c0_24 = arith.constant 0 : index
    %c0_25 = arith.constant 0 : index
    %28 = vector.load %arg4[%c0_23, %c0_24, %c0_25] : memref<1x2x128xf32, #tpu.memory_space<vmem>>, vector<1x2x128xf32>
    %29 = vector.shape_cast %28 : vector<1x2x128xf32> to vector<2x128xf32>
    %30 = vector.shape_cast %27 : vector<2x128xf32> to vector<1x2x128xf32>
    tpu.vector_store %arg4[%c0_23, %c0_24, %c0_25], %30 {strides = array<i32>} : memref<1x2x128xf32, #tpu.memory_space<vmem>>, vector<1x2x128xf32>,
    return
  }
  func.func @transform_0(%arg0: i32) -> (i32, i32, i32) {
    %c0_i32 = arith.constant 0 : i32
    %c0_i32_0 = arith.constant 0 : i32
    %c0_i32_1 = arith.constant 0 : i32
    return %arg0, %c0_i32, %c0_i32_0 : i32, i32, i32
  }
  func.func @transform_1(%arg0: i32) -> (i32, i32, i32) {
    %c0_i32 = arith.constant 0 : i32
    %c0_i32_0 = arith.constant 0 : i32
    %c0_i32_1 = arith.constant 0 : i32
    %c0_i32_2 = arith.constant 0 : i32
    return %c0_i32, %c0_i32_0, %c0_i32_1 : i32, i32, i32
  }
  func.func @transform_2(%arg0: i32) -> (i32, i32, i32) {
    %c0_i32 = arith.constant 0 : i32
    %c0_i32_0 = arith.constant 0 : i32
    %c0_i32_1 = arith.constant 0 : i32
    return %arg0, %c0_i32, %c0_i32_0 : i32, i32, i32
  }
  func.func @transform_3(%arg0: i32) -> (i32, i32, i32) {
    %c0_i32 = arith.constant 0 : i32
    %c0_i32_0 = arith.constant 0 : i32
    %c0_i32_1 = arith.constant 0 : i32
    return %arg0, %c0_i32, %c0_i32_0 : i32, i32, i32
  }
}

module attributes {stable_mosaic.version = 11 : i64} {
  func.func @bn_prelu_kernel(%arg0: i32, %arg1: memref<2x16x128xbf16, #tpu.memory_space<vmem>>, %arg2: memref<1x1x128xf32, #tpu.memory_space<vmem>>, %arg3: memref<1x1x128xf32, #tpu.memory_space<vmem>>, %arg4: memref<1x1xf32, #tpu.memory_space<smem>>, %arg5: memref<2x16x128xf32, #tpu.memory_space<vmem>>) attributes {dimension_semantics = [#tpu.dimension_semantics<parallel>], iteration_bounds = array<i64: 1>, scalar_prefetch = 0 : i64, scratch_operands = 0 : i64, tpu.core_type = #tpu.core_type<tc>, window_params = [{transform_indices = @transform_0, window_bounds = array<i64: 2, 16, 128>}, {pipeline_mode = #tpu.pipeline_mode<synchronous>, transform_indices = @transform_1, window_bounds = array<i64: 1, 1, 128>}, {pipeline_mode = #tpu.pipeline_mode<synchronous>, transform_indices = @transform_2, window_bounds = array<i64: 1, 1, 128>}, {transform_indices = @transform_3, window_bounds = array<i64: 1, 1>}, {transform_indices = @transform_4, window_bounds = array<i64: 2, 16, 128>}]} {
    %c0 = arith.constant 0 : index
    %c0_0 = arith.constant 0 : index
    %c0_1 = arith.constant 0 : index
    %0 = vector.load %arg1[%c0, %c0_0, %c0_1] : memref<2x16x128xbf16, #tpu.memory_space<vmem>>, vector<2x16x128xbf16>
    %1 = arith.extf %0 : vector<2x16x128xbf16> to vector<2x16x128xf32>
    %c0_2 = arith.constant 0 : index
    %c0_3 = arith.constant 0 : index
    %c0_4 = arith.constant 0 : index
    %2 = vector.load %arg2[%c0_2, %c0_3, %c0_4] : memref<1x1x128xf32, #tpu.memory_space<vmem>>, vector<1x1x128xf32>
    %3 = vector.broadcast %2 : vector<1x1x128xf32> to vector<2x16x128xf32>
    %4 = arith.mulf %1, %3 : vector<2x16x128xf32>
    %c0_5 = arith.constant 0 : index
    %c0_6 = arith.constant 0 : index
    %c0_7 = arith.constant 0 : index
    %5 = vector.load %arg3[%c0_5, %c0_6, %c0_7] : memref<1x1x128xf32, #tpu.memory_space<vmem>>, vector<1x1x128xf32>
    %6 = vector.broadcast %5 : vector<1x1x128xf32> to vector<2x16x128xf32>
    %7 = arith.addf %4, %6 : vector<2x16x128xf32>
    %c0_8 = arith.constant 0 : index
    %c0_9 = arith.constant 0 : index
    %8 = memref.load %arg4[%c0_8, %c0_9] : memref<1x1xf32, #tpu.memory_space<smem>>
    %cst = arith.constant 0.000000e+00 : f32
    %9 = vector.broadcast %cst : f32 to vector<2x16x128xf32>
    %10 = arith.cmpf oge, %7, %9 : vector<2x16x128xf32>
    %11 = vector.broadcast %8 : f32 to vector<2x16x128xf32>
    %12 = arith.mulf %11, %7 : vector<2x16x128xf32>
    %13 = arith.select %10, %7, %12 : vector<2x16x128xi1>, vector<2x16x128xf32>
    %c0_10 = arith.constant 0 : index
    %c0_11 = arith.constant 0 : index
    %c0_12 = arith.constant 0 : index
    %14 = vector.load %arg5[%c0_10, %c0_11, %c0_12] : memref<2x16x128xf32, #tpu.memory_space<vmem>>, vector<2x16x128xf32>
    tpu.vector_store %arg5[%c0_10, %c0_11, %c0_12], %13 {strides = array<i32>} : memref<2x16x128xf32, #tpu.memory_space<vmem>>, vector<2x16x128xf32>,
    return
  }
  func.func @transform_0(%arg0: i32) -> (i32, i32, i32) {
    %c0_i32 = arith.constant 0 : i32
    %c0_i32_0 = arith.constant 0 : i32
    %c0_i32_1 = arith.constant 0 : i32
    return %arg0, %c0_i32, %c0_i32_0 : i32, i32, i32
  }
  func.func @transform_1(%arg0: i32) -> (i32, i32, i32) {
    %c0_i32 = arith.constant 0 : i32
    %c0_i32_0 = arith.constant 0 : i32
    %c0_i32_1 = arith.constant 0 : i32
    %c0_i32_2 = arith.constant 0 : i32
    return %c0_i32, %c0_i32_0, %c0_i32_1 : i32, i32, i32
  }
  func.func @transform_2(%arg0: i32) -> (i32, i32, i32) {
    %c0_i32 = arith.constant 0 : i32
    %c0_i32_0 = arith.constant 0 : i32
    %c0_i32_1 = arith.constant 0 : i32
    %c0_i32_2 = arith.constant 0 : i32
    return %c0_i32, %c0_i32_0, %c0_i32_1 : i32, i32, i32
  }
  func.func @transform_3(%arg0: i32) -> (i32, i32) {
    %c0_i32 = arith.constant 0 : i32
    %c0_i32_0 = arith.constant 0 : i32
    %c0_i32_1 = arith.constant 0 : i32
    return %c0_i32, %c0_i32_0 : i32, i32
  }
  func.func @transform_4(%arg0: i32) -> (i32, i32, i32) {
    %c0_i32 = arith.constant 0 : i32
    %c0_i32_0 = arith.constant 0 : i32
    %c0_i32_1 = arith.constant 0 : i32
    return %arg0, %c0_i32, %c0_i32_0 : i32, i32, i32
  }
}

</mosaic_0001>

<llo_original>
// kernel: conv_block_forward.2
$region0: #{conv_block_forward.2}
  #allocation0 [shape = 'u32[]', space=smem, size = 0x4, offset = 0x4, fixed_abs, tag = 'smem constant byte address 0x4 - core index']
  #allocation1 [shape = 'u32[144,128]{1,0:T(1,128)}', space=vmem, size = 0x12000, scoped, tag = 'internal scratch']
  %s0 = inlined_call_operand.vmem [shape: bf16[2,18,128], index: 0, kind: input, shape index: {}]
  %s1 = inlined_call_operand.vmem [shape: bf16[3,128,128], index: 1, kind: input, shape index: {}]
  %s2 = inlined_call_operand.vmem [shape: bf16[2,16,128], index: 2, kind: output, shape index: {0}]
  %s3 = inlined_call_operand.vmem [shape: f32[1,2,128], index: 3, kind: output, shape index: {1}]
  %4 = xla_tuple %s2, %s3
  %s5 = sld [smem:[#allocation0]]
  $region26: #{conv_block_forward.2} parent=0
    _
  %s7 = ssub.s32 1, %s5
  %s8 = scalar_select 0, %s7, %s5
  // Predicated region
  $region2: #{conv_block_forward.2} parent=0 // pred_check
    _
  $region3: #{conv_block_forward.2} parent=0 // pred_check_branch
    %10 = sbr.rel (0) target = $region5
  $region4: #{conv_block_forward.2} parent=0 // pred_region
    _
  $region5: #{conv_block_forward.2} parent=0 // pred_fallthru
    _
  // Predicated region
  $region6: #{conv_block_forward.2} parent=0 // pred_check
    _
  $region7: #{conv_block_forward.2} parent=0 // pred_check_branch
    %12 = sbr.rel (0) target = $region9
  $region8: #{conv_block_forward.2} parent=0 // pred_region
    _
  $region9: #{conv_block_forward.2} parent=0 // pred_fallthru
    _
  %v14 = vld [vmem:[%s0] sm:$0xf]
  %v15 = vld [vmem:[%s0 + $0x4] sm:$0xf]
  %v16 = vld [vmem:[%s0 + $0xc] sm:$0xf]
  %v17 = vld [vmem:[%s0 + $0x10] sm:$0xf]
  %v18 = vld [vmem:[%s1] sm:$0xf]
  %v19 = vld [vmem:[%s1 + $0x4] sm:$0xf]
  %v20 = vld [vmem:[%s1 + $0x8] sm:$0xf]
  %v21 = vld [vmem:[%s1 + $0xc] sm:$0xf]
  %v22 = vld [vmem:[%s1 + $0x10] sm:$0xf]
  %v23 = vld [vmem:[%s1 + $0x14] sm:$0xf]
  %v24 = vld [vmem:[%s1 + $0x18] sm:$0xf]
  %v25 = vld [vmem:[%s1 + $0x1c] sm:$0xf]
  %v26 = vld [vmem:[%s1 + $0x20] sm:$0xf]
  %v27 = vld [vmem:[%s1 + $0x24] sm:$0xf]
  %v28 = vld [vmem:[%s1 + $0x28] sm:$0xf]
  %v29 = vld [vmem:[%s1 + $0x2c] sm:$0xf]
  %v30 = vld [vmem:[%s1 + $0x30] sm:$0xf]
  %v31 = vld [vmem:[%s1 + $0x34] sm:$0xf]
  %v32 = vld [vmem:[%s1 + $0x38] sm:$0xf]
  %v33 = vld [vmem:[%s1 + $0x3c] sm:$0xf]
  %v34 = vld [vmem:[%s0 + $0x8] sm:$0x1]
  %v35 = vld [vmem:[%s0 + $0x14] sm:$0x1]
  %vm36 = vsmask.f32 3328
  %vm37 = vsmask.f32 7440
  %vm38 = vmor %vm36, %vm37
  %v40 = vshrl.u32 %v14, 16
  %v42 = vrot.slane %v40, 4
  %v43 = vshll.u32 %v14, 16
  %v45 = vrot.slane %v43, 5
  %v46 = vor.u32 %v42, %v45
  %v47 = vrot.slane %v46, 4
  %v49 = vshll.u32 %v15, 16
  %v51 = vrot.slane %v49, 5
  %v52 = vsel %vm38, %v47, %v51
  %v53 = vshrl.u32 %v15, 16
  %v55 = vrot.slane %v53, 4
  %v56 = vor.u32 %v55, %v51
  %v57 = vrot.slane %v56, 4
  %v59 = vshll.u32 %v34, 16
  %v61 = vrot.slane %v59, 5
  %v62 = vsel %vm38, %v57, %v61
  %v64 = vshrl.u32 %v16, 16
  %v66 = vrot.slane %v64, 4
  %v67 = vshll.u32 %v16, 16
  %v69 = vrot.slane %v67, 5
  %v70 = vor.u32 %v66, %v69
  %v71 = vrot.slane %v70, 4
  %v73 = vshll.u32 %v17, 16
  %v75 = vrot.slane %v73, 5
  %v76 = vsel %vm38, %v71, %v75
  %v77 = vshrl.u32 %v17, 16
  %v79 = vrot.slane %v77, 4
  %v80 = vor.u32 %v79, %v75
  %v81 = vrot.slane %v80, 4
  %v83 = vshll.u32 %v35, 16
  %v85 = vrot.slane %v83, 5
  %v86 = vsel %vm38, %v81, %v85
  %s87 = scalar_lea.vmem %s1, 64
  %v88 = vld [vmem:[%s87] sm:$0xf]
  %v89 = vld [vmem:[%s87 + $0x4] sm:$0xf]
  %v90 = vld [vmem:[%s87 + $0x8] sm:$0xf]
  %v91 = vld [vmem:[%s87 + $0xc] sm:$0xf]
  %v92 = vld [vmem:[%s87 + $0x10] sm:$0xf]
  %v93 = vld [vmem:[%s87 + $0x14] sm:$0xf]
  %v94 = vld [vmem:[%s87 + $0x18] sm:$0xf]
  %v95 = vld [vmem:[%s87 + $0x1c] sm:$0xf]
  %v96 = vld [vmem:[%s87 + $0x20] sm:$0xf]
  %v97 = vld [vmem:[%s87 + $0x24] sm:$0xf]
  %v98 = vld [vmem:[%s87 + $0x28] sm:$0xf]
  %v99 = vld [vmem:[%s87 + $0x2c] sm:$0xf]
  %v100 = vld [vmem:[%s87 + $0x30] sm:$0xf]
  %v101 = vld [vmem:[%s87 + $0x34] sm:$0xf]
  %v102 = vld [vmem:[%s87 + $0x38] sm:$0xf]
  %v103 = vld [vmem:[%s87 + $0x3c] sm:$0xf]
  %v104 = vunpack.c.l.b16 %v52
  %v105 = vunpack.c.l.b16 %v62
  %v106 = vunpack.c.l.b16 %v76
  %v107 = vunpack.c.l.b16 %v86
  %v108 = vpack.c.b16 %v105, %v104
  %v109 = vpack.c.b16 %v107, %v106
  %v128 = vunpack.c.l.b16 %v88
  %v129 = vunpack.c.l.b16 %v89
  %v130 = vunpack.c.l.b16 %v90
  %v131 = vunpack.c.l.b16 %v91
  %v132 = vunpack.c.l.b16 %v92
  %v133 = vunpack.c.l.b16 %v93
  %v134 = vunpack.c.l.b16 %v94
  %v135 = vunpack.c.l.b16 %v95
  %v136 = vunpack.c.l.b16 %v96
  %v137 = vunpack.c.l.b16 %v97
  %v138 = vunpack.c.l.b16 %v98
  %v139 = vunpack.c.l.b16 %v99
  %v140 = vunpack.c.l.b16 %v100
  %v141 = vunpack.c.l.b16 %v101
  %v142 = vunpack.c.l.b16 %v102
  %v143 = vunpack.c.l.b16 %v103
  %v144 = vpack.c.b16 %v129, %v128
  %v145 = vpack.c.b16 %v131, %v130
  %v146 = vpack.c.b16 %v133, %v132
  %v147 = vpack.c.b16 %v135, %v134
  %v148 = vpack.c.b16 %v137, %v136
  %v149 = vpack.c.b16 %v139, %v138
  %v150 = vpack.c.b16 %v141, %v140
  %v151 = vpack.c.b16 %v143, %v142
  %160 = vmatprep.subr.bf16.mxu0 0
  %161 = vmatpush1.bf16.msra.mxu0 %v144
  %162 = vmatprep.subr.bf16.mxu0 0
  %163 = vmatpush1.bf16.msra.mxu0 %v145
  %164 = vmatprep.subr.bf16.mxu0 0
  %165 = vmatpush1.bf16.msra.mxu0 %v146
  %166 = vmatprep.subr.bf16.mxu0 0
  %167 = vmatpush1.bf16.msra.mxu0 %v147
  %168 = vmatprep.subr.bf16.mxu0 0
  %169 = vmatpush1.bf16.msra.mxu0 %v148
  %170 = vmatprep.subr.bf16.mxu0 0
  %171 = vmatpush1.bf16.msra.mxu0 %v149
  %172 = vmatprep.subr.bf16.mxu0 0
  %173 = vmatpush1.bf16.msra.mxu0 %v150
  %174 = vmatprep.subr.bf16.mxu0 0
  %175 = vmatpush1.bf16.msra.mxu0 %v151
  %176 = vmatprep.subr.bf16.mxu0 0
  %177 = vmatpush1.bf16.msra.mxu0 0
  %178 = vmatprep.subr.bf16.mxu0 0
  %179 = vmatpush1.bf16.msra.mxu0 0
  %180 = vmatprep.subr.bf16.mxu0 0
  %181 = vmatpush1.bf16.msra.mxu0 0
  %182 = vmatprep.subr.bf16.mxu0 0
  %183 = vmatpush1.bf16.msra.mxu0 0
  %184 = vmatprep.subr.bf16.mxu0 0
  %185 = vmatpush1.bf16.msra.mxu0 0
  %186 = vmatprep.subr.bf16.mxu0 0
  %187 = vmatpush1.bf16.msra.mxu0 0
  %188 = vmatprep.subr.bf16.mxu0 0
  %189 = vmatpush1.bf16.msra.mxu0 0
  %190 = vmatprep.subr.bf16.mxu0 0
  %191 = vmatpush1.bf16.msra.mxu0 0
  %192 = vmatprep.mubr.bf16.mxu0 0
  %193 = vmatmul.mubr.bf16.gmra.mrb[0].mxu0 %v108
  %v194 = vpop.f32.mrb[0].mxu0
  %v195 = vadd.f32 0.0, %v194
  %v196 = vpop.f32.mrb[0].mxu0
  %v197 = vpop.f32.mrb[0].mxu0
  %v198 = vadd.f32 0.0, %v197
  %v199 = vpop.f32.mrb[0].mxu0
  %200 = vmatprep.mubr.bf16.mxu0 0
  %201 = vmatmul.mubr.bf16.gmra.mrb[0].mxu0 %v109
  %v202 = vpop.f32.mrb[0].mxu0
  %v203 = vadd.f32 0.0, %v202
  %v204 = vpop.f32.mrb[0].mxu0
  %v205 = vpop.f32.mrb[0].mxu0
  %v206 = vadd.f32 0.0, %v205
  %v207 = vpop.f32.mrb[0].mxu0
  %208 = vdwg.mxu0
  %v213 = vunpack.c.l.b16 %v14
  %v214 = vunpack.c.l.b16 %v15
  %v215 = vunpack.c.l.b16 %v16
  %v216 = vunpack.c.l.b16 %v17
  %v217 = vpack.c.b16 %v214, %v213
  %v218 = vpack.c.b16 %v216, %v215
  %v237 = vunpack.c.l.b16 %v18
  %v238 = vunpack.c.l.b16 %v19
  %v239 = vunpack.c.l.b16 %v20
  %v240 = vunpack.c.l.b16 %v21
  %v241 = vunpack.c.l.b16 %v22
  %v242 = vunpack.c.l.b16 %v23
  %v243 = vunpack.c.l.b16 %v24
  %v244 = vunpack.c.l.b16 %v25
  %v245 = vunpack.c.l.b16 %v26
  %v246 = vunpack.c.l.b16 %v27
  %v247 = vunpack.c.l.b16 %v28
  %v248 = vunpack.c.l.b16 %v29
  %v249 = vunpack.c.l.b16 %v30
  %v250 = vunpack.c.l.b16 %v31
  %v251 = vunpack.c.l.b16 %v32
  %v252 = vunpack.c.l.b16 %v33
  %v253 = vpack.c.b16 %v238, %v237
  %v254 = vpack.c.b16 %v240, %v239
  %v255 = vpack.c.b16 %v242, %v241
  %v256 = vpack.c.b16 %v244, %v243
  %v257 = vpack.c.b16 %v246, %v245
  %v258 = vpack.c.b16 %v248, %v247
  %v259 = vpack.c.b16 %v250, %v249
  %v260 = vpack.c.b16 %v252, %v251
  %269 = vmatprep.subr.bf16.mxu0 0
  %270 = vmatpush1.bf16.msra.mxu0 %v253
  %271 = vmatprep.subr.bf16.mxu0 0
  %272 = vmatpush1.bf16.msra.mxu0 %v254
  %273 = vmatprep.subr.bf16.mxu0 0
  %274 = vmatpush1.bf16.msra.mxu0 %v255
  %275 = vmatprep.subr.bf16.mxu0 0
  %276 = vmatpush1.bf16.msra.mxu0 %v256
  %277 = vmatprep.subr.bf16.mxu0 0
  %278 = vmatpush1.bf16.msra.mxu0 %v257
  %279 = vmatprep.subr.bf16.mxu0 0
  %280 = vmatpush1.bf16.msra.mxu0 %v258
  %281 = vmatprep.subr.bf16.mxu0 0
  %282 = vmatpush1.bf16.msra.mxu0 %v259
  %283 = vmatprep.subr.bf16.mxu0 0
  %284 = vmatpush1.bf16.msra.mxu0 %v260
  %285 = vmatprep.subr.bf16.mxu0 0
  %286 = vmatpush1.bf16.msra.mxu0 0
  %287 = vmatprep.subr.bf16.mxu0 0
  %288 = vmatpush1.bf16.msra.mxu0 0
  %289 = vmatprep.subr.bf16.mxu0 0
  %290 = vmatpush1.bf16.msra.mxu0 0
  %291 = vmatprep.subr.bf16.mxu0 0
  %292 = vmatpush1.bf16.msra.mxu0 0
  %293 = vmatprep.subr.bf16.mxu0 0
  %294 = vmatpush1.bf16.msra.mxu0 0
  %295 = vmatprep.subr.bf16.mxu0 0
  %296 = vmatpush1.bf16.msra.mxu0 0
  %297 = vmatprep.subr.bf16.mxu0 0
  %298 = vmatpush1.bf16.msra.mxu0 0
  %299 = vmatprep.subr.bf16.mxu0 0
  %300 = vmatpush1.bf16.msra.mxu0 0
  %301 = vmatprep.mubr.bf16.mxu0 0
  %302 = vmatmul.mubr.bf16.gmra.mrb[0].mxu0 %v217
  %v303 = vpop.f32.mrb[0].mxu0
  %v304 = vadd.f32 %v195, %v303
  %v305 = vpop.f32.mrb[0].mxu0
  %v306 = vpop.f32.mrb[0].mxu0
  %v307 = vadd.f32 %v198, %v306
  %v308 = vpop.f32.mrb[0].mxu0
  %309 = vmatprep.mubr.bf16.mxu0 0
  %310 = vmatmul.mubr.bf16.gmra.mrb[0].mxu0 %v218
  %v311 = vpop.f32.mrb[0].mxu0
  %v312 = vadd.f32 %v203, %v311
  %v313 = vpop.f32.mrb[0].mxu0
  %v314 = vpop.f32.mrb[0].mxu0
  %v315 = vadd.f32 %v206, %v314
  %v316 = vpop.f32.mrb[0].mxu0
  %317 = vdwg.mxu0
  %v318 = vld [vmem:[%s0] sm:$0xe]
  %v319 = vld [vmem:[%s0 + $0xc] sm:$0xe]
  %vm324 = vcmask 1042432
  %vm325 = vcmask 1046532
  %vm326 = vmor %vm324, %vm325
  %v327 = vrot.slane %v318, 5
  %v328 = vrot.slane %v327, 4
  %v329 = vrot.slane %v15, 5
  %v330 = vsel %vm326, %v328, %v329
  %v331 = vrot.slane %v329, 4
  %v332 = vrot.slane %v34, 5
  %v333 = vsel %vm326, %v331, %v332
  %v334 = vrot.slane %v319, 5
  %v335 = vrot.slane %v334, 4
  %v336 = vrot.slane %v17, 5
  %v337 = vsel %vm326, %v335, %v336
  %v338 = vrot.slane %v336, 4
  %v339 = vrot.slane %v35, 5
  %v340 = vsel %vm326, %v338, %v339
  %s341 = scalar_lea.vmem %s1, 128
  %v342 = vld [vmem:[%s341] sm:$0xf]
  %v343 = vld [vmem:[%s341 + $0x4] sm:$0xf]
  %v344 = vld [vmem:[%s341 + $0x8] sm:$0xf]
  %v345 = vld [vmem:[%s341 + $0xc] sm:$0xf]
  %v346 = vld [vmem:[%s341 + $0x10] sm:$0xf]
  %v347 = vld [vmem:[%s341 + $0x14] sm:$0xf]
  %v348 = vld [vmem:[%s341 + $0x18] sm:$0xf]
  %v349 = vld [vmem:[%s341 + $0x1c] sm:$0xf]
  %v350 = vld [vmem:[%s341 + $0x20] sm:$0xf]
  %v351 = vld [vmem:[%s341 + $0x24] sm:$0xf]
  %v352 = vld [vmem:[%s341 + $0x28] sm:$0xf]
  %v353 = vld [vmem:[%s341 + $0x2c] sm:$0xf]
  %v354 = vld [vmem:[%s341 + $0x30] sm:$0xf]
  %v355 = vld [vmem:[%s341 + $0x34] sm:$0xf]
  %v356 = vld [vmem:[%s341 + $0x38] sm:$0xf]
  %v357 = vld [vmem:[%s341 + $0x3c] sm:$0xf]
  %v358 = vunpack.c.l.b16 %v330
  %v359 = vunpack.c.l.b16 %v333
  %v360 = vunpack.c.l.b16 %v337
  %v361 = vunpack.c.l.b16 %v340
  %v362 = vpack.c.b16 %v359, %v358
  %v363 = vpack.c.b16 %v361, %v360
  %v382 = vunpack.c.l.b16 %v342
  %v383 = vunpack.c.l.b16 %v343
  %v384 = vunpack.c.l.b16 %v344
  %v385 = vunpack.c.l.b16 %v345
  %v386 = vunpack.c.l.b16 %v346
  %v387 = vunpack.c.l.b16 %v347
  %v388 = vunpack.c.l.b16 %v348
  %v389 = vunpack.c.l.b16 %v349
  %v390 = vunpack.c.l.b16 %v350
  %v391 = vunpack.c.l.b16 %v351
  %v392 = vunpack.c.l.b16 %v352
  %v393 = vunpack.c.l.b16 %v353
  %v394 = vunpack.c.l.b16 %v354
  %v395 = vunpack.c.l.b16 %v355
  %v396 = vunpack.c.l.b16 %v356
  %v397 = vunpack.c.l.b16 %v357
  %v398 = vpack.c.b16 %v383, %v382
  %v399 = vpack.c.b16 %v385, %v384
  %v400 = vpack.c.b16 %v387, %v386
  %v401 = vpack.c.b16 %v389, %v388
  %v402 = vpack.c.b16 %v391, %v390
  %v403 = vpack.c.b16 %v393, %v392
  %v404 = vpack.c.b16 %v395, %v394
  %v405 = vpack.c.b16 %v397, %v396
  %414 = vmatprep.subr.bf16.mxu0 0
  %415 = vmatpush1.bf16.msra.mxu0 %v398
  %416 = vmatprep.subr.bf16.mxu0 0
  %417 = vmatpush1.bf16.msra.mxu0 %v399
  %418 = vmatprep.subr.bf16.mxu0 0
  %419 = vmatpush1.bf16.msra.mxu0 %v400
  %420 = vmatprep.subr.bf16.mxu0 0
  %421 = vmatpush1.bf16.msra.mxu0 %v401
  %422 = vmatprep.subr.bf16.mxu0 0
  %423 = vmatpush1.bf16.msra.mxu0 %v402
  %424 = vmatprep.subr.bf16.mxu0 0
  %425 = vmatpush1.bf16.msra.mxu0 %v403
  %426 = vmatprep.subr.bf16.mxu0 0
  %427 = vmatpush1.bf16.msra.mxu0 %v404
  %428 = vmatprep.subr.bf16.mxu0 0
  %429 = vmatpush1.bf16.msra.mxu0 %v405
  %430 = vmatprep.subr.bf16.mxu0 0
  %431 = vmatpush1.bf16.msra.mxu0 0
  %432 = vmatprep.subr.bf16.mxu0 0
  %433 = vmatpush1.bf16.msra.mxu0 0
  %434 = vmatprep.subr.bf16.mxu0 0
  %435 = vmatpush1.bf16.msra.mxu0 0
  %436 = vmatprep.subr.bf16.mxu0 0
  %437 = vmatpush1.bf16.msra.mxu0 0
  %438 = vmatprep.subr.bf16.mxu0 0
  %439 = vmatpush1.bf16.msra.mxu0 0
  %440 = vmatprep.subr.bf16.mxu0 0
  %441 = vmatpush1.bf16.msra.mxu0 0
  %442 = vmatprep.subr.bf16.mxu0 0
  %443 = vmatpush1.bf16.msra.mxu0 0
  %444 = vmatprep.subr.bf16.mxu0 0
  %445 = vmatpush1.bf16.msra.mxu0 0
  %446 = vmatprep.mubr.bf16.mxu0 0
  %447 = vmatmul.mubr.bf16.gmra.mrb[0].mxu0 %v362
  %v448 = vpop.f32.mrb[0].mxu0
  %v449 = vadd.f32 0.0, %v448
  %v450 = vpop.f32.mrb[0].mxu0
  %v451 = vpop.f32.mrb[0].mxu0
  %v452 = vadd.f32 0.0, %v451
  %v453 = vpop.f32.mrb[0].mxu0
  %454 = vmatprep.mubr.bf16.mxu0 0
  %455 = vmatmul.mubr.bf16.gmra.mrb[0].mxu0 %v363
  %v456 = vpop.f32.mrb[0].mxu0
  %v457 = vadd.f32 0.0, %v456
  %v458 = vpop.f32.mrb[0].mxu0
  %v459 = vpop.f32.mrb[0].mxu0
  %v460 = vadd.f32 0.0, %v459
  %v461 = vpop.f32.mrb[0].mxu0
  %462 = vdwg.mxu0
  %v463 = vadd.f32 %v304, %v449
  %v464 = vadd.f32 %v307, %v452
  %v465 = vadd.f32 %v312, %v457
  %v466 = vadd.f32 %v315, %v460
  %v467 = vpack.c.bf16 %v464, %v463
  %v468 = vpack.c.bf16 %v466, %v465
  %v471 = vunpack.c.l.b16 %v467
  %v472 = vunpack.c.h.b16 %v467
  %v473 = vunpack.c.l.b16 %v468
  %v474 = vunpack.c.h.b16 %v468
  %v475 = vpack.c.b16 %v471, %v471
  %v476 = vpack.c.b16 %v472, %v472
  %v477 = vpack.c.b16 %v473, %v473
  %v478 = vpack.c.b16 %v474, %v474
  %483 = vst [vmem:[%s2] sm:$0xf] %v475
  %484 = vst [vmem:[%s2 + $0x4] sm:$0xf] %v476
  %485 = vst [vmem:[%s2 + $0x8] sm:$0xf] %v477
  %486 = vst [vmem:[%s2 + $0xc] sm:$0xf] %v478
  %v487 = vadd.f32 %v463, %v464
  %v488 = vadd.f32 %v487, %v465
  %v489 = vadd.f32 %v488, %v466
  %v490 = vrot.slane %v489, 4
  %v491 = vadd.f32 %v489, %v490
  %v492 = vrot.slane %v491, 2
  %v493 = vadd.f32 %v491, %v492
  %v494 = vrot.slane %v493, 1
  %v495 = vadd.f32 %v493, %v494
  %v496 = vmul.f32 %v463, %v463
  %v497 = vmul.f32 %v464, %v464
  %v498 = vmul.f32 %v465, %v465
  %v499 = vmul.f32 %v466, %v466
  %v500 = vadd.f32 %v496, %v497
  %v501 = vadd.f32 %v500, %v498
  %v502 = vadd.f32 %v501, %v499
  %v503 = vrot.slane %v502, 4
  %v504 = vadd.f32 %v502, %v503
  %v505 = vrot.slane %v504, 2
  %v506 = vadd.f32 %v504, %v505
  %v507 = vrot.slane %v506, 1
  %v508 = vadd.f32 %v506, %v507
  %vm509 = vcmask 1040384
  %v510 = vsel %vm509, %v495, %v508
  %511 = vst [vmem:[%s3] sm:$0x3] %v510
  // Predicated region
  $region10: #{conv_block_forward.2} parent=0 // pred_check
    _
  $region11: #{conv_block_forward.2} parent=0 // pred_check_branch
    %513 = sbr.rel (0) target = $region13
  $region12: #{conv_block_forward.2} parent=0 // pred_region
    _
  $region13: #{conv_block_forward.2} parent=0 // pred_fallthru
    _
  // Predicated region
  $region14: #{conv_block_forward.2} parent=0 // pred_check
    _
  $region15: #{conv_block_forward.2} parent=0 // pred_check_branch
    %515 = sbr.rel (0) target = $region17
  $region16: #{conv_block_forward.2} parent=0 // pred_region
    _
  $region17: #{conv_block_forward.2} parent=0 // pred_fallthru
    _
  // Predicated region
  $region18: #{conv_block_forward.2} parent=0 // pred_check
    _
  $region19: #{conv_block_forward.2} parent=0 // pred_check_branch
    %517 = sbr.rel (0) target = $region21
  $region20: #{conv_block_forward.2} parent=0 // pred_region
    _
  $region21: #{conv_block_forward.2} parent=0 // pred_fallthru
    _
  // Predicated region
  $region22: #{conv_block_forward.2} parent=0 // pred_check
    _
  $region23: #{conv_block_forward.2} parent=0 // pred_check_branch
    %519 = sbr.rel (0) target = $region25
  $region24: #{conv_block_forward.2} parent=0 // pred_region
    _
  $region25: #{conv_block_forward.2} parent=0 // pred_fallthru
    _

// kernel: tile.13
$region0: #{tile.13}
  #allocation0 [shape = 's32[1]{0}', space=sflag, size = 0x4, scoped, tag = 'scoped memory for tile.13']
  %s0 = inlined_call_operand.vmem [shape: f32[8], index: 0, kind: input, shape index: {}]
  %s1 = inlined_call_operand.vmem [shape: f32[16,8], index: 1, kind: output, shape index: {}]
  // Predicated region
  $region2: #{tile.13} parent=0 // pred_check
    _
  $region3: #{tile.13} parent=0 // pred_check_branch
    %3 = sbr.rel (0) target = $region5
  $region4: #{tile.13} parent=0 // pred_region
    _
  $region5: #{tile.13} parent=0 // pred_fallthru
    _
  %v4 = vld [vmem:[%s0] ss:$0 sm:$0xff]
  %5 = vst [vmem:[%s1] sm:$0xff] %v4
  %s6 = scalar_lea.vmem %s1, 8
  %7 = vst [vmem:[%s6] sm:$0xff] %v4

// kernel: tile.14
$region0: #{tile.14}
  %s0 = inlined_call_operand.vmem [shape: f32[16,8], index: 0, kind: input, shape index: {}]
  %s1 = inlined_call_operand.vmem [shape: f32[1,1,128], index: 1, kind: output, shape index: {}]
  $region1: #{tile.14} parent=0
    #allocation0 [shape = 'u8[4096]{0}', space=vmem, size = 0x1000, scoped, tag = 'scoped mem for output reshape']
    %v2 = vld [vmem:[%s0] sm:$0x1]
    %vm3 = vcmask 64512
    %4 = vst.msk [vmem:[#allocation0] sm:$0x1] %vm3, %v2
    %s5 = scalar_lea.vmem %s0, 15
    %v6 = vld [vmem:[%s5] sm:$0x1]
    %7 = vrot.lane.b32.xlu0 %v6, 120
    %v8 = vpop.permute.xlu0 %7
    %vm9 = vcmask 1048512
    %10 = vst.msk [vmem:[#allocation0] sm:$0x1] %vm9, %v8
    %s11 = scalar_lea.vmem %s0, 14
    %v12 = vld [vmem:[%s11] sm:$0x1]
    %13 = vrot.lane.b32.xlu0 %v12, 112
    %v14 = vpop.permute.xlu0 %13
    %vm15 = vcmask 982912
    %16 = vst.msk [vmem:[#allocation0] sm:$0x1] %vm15, %v14
    %s17 = scalar_lea.vmem %s0, 13
    %v18 = vld [vmem:[%s17] sm:$0x1]
    %19 = vrot.lane.b32.xlu0 %v18, 104
    %v20 = vpop.permute.xlu0 %19
    %vm21 = vcmask 917312
    %22 = vst.msk [vmem:[#allocation0] sm:$0x1] %vm21, %v20
    %s23 = scalar_lea.vmem %s0, 12
    %v24 = vld [vmem:[%s23] sm:$0x1]
    %25 = vrot.lane.b32.xlu0 %v24, 96
    %v26 = vpop.permute.xlu0 %25
    %vm27 = vcmask 851712
    %28 = vst.msk [vmem:[#allocation0] sm:$0x1] %vm27, %v26
    %s29 = scalar_lea.vmem %s0, 11
    %v30 = vld [vmem:[%s29] sm:$0x1]
    %31 = vrot.lane.b32.xlu0 %v30, 88
    %v32 = vpop.permute.xlu0 %31
    %vm33 = vcmask 786112
    %34 = vst.msk [vmem:[#allocation0] sm:$0x1] %vm33, %v32
    %s35 = scalar_lea.vmem %s0, 10
    %v36 = vld [vmem:[%s35] sm:$0x1]
    %37 = vrot.lane.b32.xlu0 %v36, 80
    %v38 = vpop.permute.xlu0 %37
    %vm39 = vcmask 720512
    %40 = vst.msk [vmem:[#allocation0] sm:$0x1] %vm39, %v38
    %s41 = scalar_lea.vmem %s0, 9
    %v42 = vld [vmem:[%s41] sm:$0x1]
    %43 = vrot.lane.b32.xlu0 %v42, 72
    %v44 = vpop.permute.xlu0 %43
    %vm45 = vcmask 654912
    %46 = vst.msk [vmem:[#allocation0] sm:$0x1] %vm45, %v44
    %s47 = scalar_lea.vmem %s0, 8
    %v48 = vld [vmem:[%s47] sm:$0x1]
    %49 = vrot.lane.b32.xlu0 %v48, 64
    %v50 = vpop.permute.xlu0 %49
    %vm51 = vcmask 589312
    %52 = vst.msk [vmem:[#allocation0] sm:$0x1] %vm51, %v50
    %s53 = scalar_lea.vmem %s0, 7
    %v54 = vld [vmem:[%s53] sm:$0x1]
    %55 = vrot.lane.b32.xlu0 %v54, 56
    %v56 = vpop.permute.xlu0 %55
    %vm57 = vcmask 523712
    %58 = vst.msk [vmem:[#allocation0] sm:$0x1] %vm57, %v56
    %s59 = scalar_lea.vmem %s0, 6
    %v60 = vld [vmem:[%s59] sm:$0x1]
    %61 = vrot.lane.b32.xlu0 %v60, 48
    %v62 = vpop.permute.xlu0 %61
    %vm63 = vcmask 458112
    %64 = vst.msk [vmem:[#allocation0] sm:$0x1] %vm63, %v62
    %s65 = scalar_lea.vmem %s0, 5
    %v66 = vld [vmem:[%s65] sm:$0x1]
    %67 = vrot.lane.b32.xlu0 %v66, 40
    %v68 = vpop.permute.xlu0 %67
    %vm69 = vcmask 392512
    %70 = vst.msk [vmem:[#allocation0] sm:$0x1] %vm69, %v68
    %s71 = scalar_lea.vmem %s0, 4
    %v72 = vld [vmem:[%s71] sm:$0x1]
    %73 = vrot.lane.b32.xlu0 %v72, 32
    %v74 = vpop.permute.xlu0 %73
    %vm75 = vcmask 326912
    %76 = vst.msk [vmem:[#allocation0] sm:$0x1] %vm75, %v74
    %s77 = scalar_lea.vmem %s0, 3
    %v78 = vld [vmem:[%s77] sm:$0x1]
    %79 = vrot.lane.b32.xlu0 %v78, 24
    %v80 = vpop.permute.xlu0 %79
    %vm81 = vcmask 261312
    %82 = vst.msk [vmem:[#allocation0] sm:$0x1] %vm81, %v80
    %s83 = scalar_lea.vmem %s0, 2
    %v84 = vld [vmem:[%s83] sm:$0x1]
    %85 = vrot.lane.b32.xlu0 %v84, 16
    %v86 = vpop.permute.xlu0 %85
    %vm87 = vcmask 195712
    %88 = vst.msk [vmem:[#allocation0] sm:$0x1] %vm87, %v86
    %s89 = scalar_lea.vmem %s0, 1
    %v90 = vld [vmem:[%s89] sm:$0x1]
    %91 = vrot.lane.b32.xlu0 %v90, 8
    %v92 = vpop.permute.xlu0 %91
    %vm93 = vcmask 130112
    %94 = vst.msk [vmem:[#allocation0] sm:$0x1] %vm93, %v92
    %s96 = sshllo.u32 0, 1
    %v98 = vld [vmem:[#allocation0] sm:%s96]
    %s99 = sshllo.u32 0, 1
    %100 = vst [vmem:[%s1] sm:%s99] %v98

// kernel: conv_block_forward.3
$region0: #{conv_block_forward.3}
  #allocation0 [shape = 'u32[]', space=smem, size = 0x4, offset = 0x4, fixed_abs, tag = 'smem constant byte address 0x4 - core index']
  #allocation1 [shape = 'u32[144,128]{1,0:T(1,128)}', space=vmem, size = 0x12000, scoped, tag = 'internal scratch']
  #allocation2 [shape = 'f32[1,1]{1,0:T(1,128)S(6)}', space=smem, size = 0x200, scoped, tag = 'scoped memory for conv_block_forward.3']
  %s0 = inlined_call_operand.vmem [shape: bf16[2,16,128], index: 0, kind: input, shape index: {}]
  %s1 = inlined_call_operand.vmem [shape: f32[1,1,128], index: 1, kind: input, shape index: {}]
  %s2 = inlined_call_operand.vmem [shape: f32[1,1,128], index: 2, kind: input, shape index: {}]
  %s3 = inlined_call_operand.<no memory space> [shape: f32[1,1], index: 3, kind: input, shape index: {}]
  %s4 = inlined_call_operand.vmem [shape: f32[2,16,128], index: 4, kind: output, shape index: {}]
  %s5 = sld [smem:[#allocation0]]
  $region26: #{conv_block_forward.3} parent=0
    _
  %s7 = ssub.s32 1, %s5
  %s8 = scalar_select 0, %s7, %s5
  %9 = sst [smem:[#allocation2]] %s3
  // Predicated region
  $region2: #{conv_block_forward.3} parent=0 // pred_check
    _
  $region3: #{conv_block_forward.3} parent=0 // pred_check_branch
    %11 = sbr.rel (0) target = $region5
  $region4: #{conv_block_forward.3} parent=0 // pred_region
    _
  $region5: #{conv_block_forward.3} parent=0 // pred_fallthru
    _
  // Predicated region
  $region6: #{conv_block_forward.3} parent=0 // pred_check
    _
  $region7: #{conv_block_forward.3} parent=0 // pred_check_branch
    %13 = sbr.rel (0) target = $region9
  $region8: #{conv_block_forward.3} parent=0 // pred_region
    _
  $region9: #{conv_block_forward.3} parent=0 // pred_fallthru
    _
  // Predicated region
  $region10: #{conv_block_forward.3} parent=0 // pred_check
    _
  $region11: #{conv_block_forward.3} parent=0 // pred_check_branch
    %15 = sbr.rel (0) target = $region13
  $region12: #{conv_block_forward.3} parent=0 // pred_region
    _
  $region13: #{conv_block_forward.3} parent=0 // pred_fallthru
    _
  // Predicated region
  $region14: #{conv_block_forward.3} parent=0 // pred_check
    _
  $region15: #{conv_block_forward.3} parent=0 // pred_check_branch
    %17 = sbr.rel (0) target = $region17
  $region16: #{conv_block_forward.3} parent=0 // pred_region
    _
  $region17: #{conv_block_forward.3} parent=0 // pred_fallthru
    _
  %v18 = vld [vmem:[%s0] sm:$0xf]
  %v19 = vld [vmem:[%s0 + $0x4] sm:$0xf]
  %v20 = vld [vmem:[%s0 + $0x8] sm:$0xf]
  %v21 = vld [vmem:[%s0 + $0xc] sm:$0xf]
  %v22 = vunpack.c.l.bf16 %v18
  %v23 = vunpack.c.l.bf16 %v19
  %v24 = vunpack.c.l.bf16 %v20
  %v25 = vunpack.c.l.bf16 %v21
  %v26 = vld [vmem:[%s1] sm:$0x1]
  %v28 = vlaneseq
  %v29 = vshrl.u32 %v28, 7
  %v30 = vsub.s32 0, %v29
  %v31 = vrot.slane %v26, %v30
  %v33 = vmul.f32 %v22, %v31
  %v34 = vmul.f32 %v23, %v31
  %v35 = vmul.f32 %v24, %v31
  %v36 = vmul.f32 %v25, %v31
  %v37 = vld [vmem:[%s2] sm:$0x1]
  %v39 = vlaneseq
  %v40 = vshrl.u32 %v39, 7
  %v41 = vsub.s32 0, %v40
  %v42 = vrot.slane %v37, %v41
  %v44 = vadd.f32 %v33, %v42
  %v45 = vadd.f32 %v34, %v42
  %v46 = vadd.f32 %v35, %v42
  %v47 = vadd.f32 %v36, %v42
  %s48 = sld [smem:[#allocation2]]
  %vm49 = vcmp.ge.f32.partialorder %v44, 0.0
  %vm50 = vcmp.ge.f32.partialorder %v45, 0.0
  %vm51 = vcmp.ge.f32.partialorder %v46, 0.0
  %vm52 = vcmp.ge.f32.partialorder %v47, 0.0
  %v53 = vstv %s48
  %v54 = vmul.f32 %v53, %v44
  %v55 = vmul.f32 %v53, %v45
  %v56 = vmul.f32 %v53, %v46
  %v57 = vmul.f32 %v53, %v47
  %v58 = vsel %vm49, %v44, %v54
  %v59 = vsel %vm50, %v45, %v55
  %v60 = vsel %vm51, %v46, %v56
  %v61 = vsel %vm52, %v47, %v57
  %62 = vst [vmem:[%s4] sm:$0xff] %v58
  %63 = vst [vmem:[%s4 + $0x8] sm:$0xff] %v59
  %64 = vst [vmem:[%s4 + $0x10] sm:$0xff] %v60
  %65 = vst [vmem:[%s4 + $0x18] sm:$0xff] %v61
  // Predicated region
  $region18: #{conv_block_forward.3} parent=0 // pred_check
    _
  $region19: #{conv_block_forward.3} parent=0 // pred_check_branch
    %67 = sbr.rel (0) target = $region21
  $region20: #{conv_block_forward.3} parent=0 // pred_region
    _
  $region21: #{conv_block_forward.3} parent=0 // pred_fallthru
    _
  // Predicated region
  $region22: #{conv_block_forward.3} parent=0 // pred_check
    _
  $region23: #{conv_block_forward.3} parent=0 // pred_check_branch
    %69 = sbr.rel (0) target = $region25
  $region24: #{conv_block_forward.3} parent=0 // pred_region
    _
  $region25: #{conv_block_forward.3} parent=0 // pred_fallthru
    _

</llo_original>
